<compile_context>
chip_gen: v6e
topology: v6e:2x2x1
jax: 0.10.0
libtpu: 0.0.40
codegen_flags: <defaults>
</compile_context>

<pallas_src>
import jax
import jax.numpy as jnp
from jax.experimental import pallas as pl
from jax.experimental.pallas import tpu as pltpu


def _attn_kernel(enc_ref, h2_ref, ue_ref, uh_ref, c_ref, o_ref):
    # enc_ref: (TB, S, H)  encoder outputs for TB batch rows
    # h2_ref : (TB, 2H)    concat(hidden[0], hidden[1]) rows
    # ue_ref : (1, H)      encoder part of u = W^T v
    # uh_ref : (1, 2H)     hidden part of u
    # c_ref  : (1, 1)      v . b
    # o_ref  : (TB, S)     softmax over the sequence axis
    enc = enc_ref[...]                                                 # (TB, S, H)
    ue = ue_ref[...]                                                   # (1, H)
    # e_enc[b, s] = enc[b, s, :] . u_e   (VPU multiply + cross-lane reduce)
    e = jnp.sum(enc * ue[None, :, :], axis=-1)                         # (TB, S)
    # per-batch offset: hidden2[b] . u_h + v.b   (constant over S)
    off = jnp.sum(h2_ref[...] * uh_ref[...], axis=-1, keepdims=True)   # (TB, 1)
    e = e + off + c_ref[...]                                           # (TB, S)
    # numerically-stable softmax over S (all f32)
    m = jnp.max(e, axis=-1, keepdims=True)
    p = jnp.exp(e - m)
    denom = jnp.sum(p, axis=-1, keepdims=True)
    # approx=False keeps full precision (the 1e-5 check); divisor is only
    # (TB, 1) so the epilogue cost is negligible either way.
    o_ref[...] = (p * pl.reciprocal(denom, approx=False)).astype(o_ref.dtype)


def attn_forward(hidden, encoder_outputs, W, b, v):
    """hidden: (2, B, H); encoder_outputs: (B, S, H); W: (H, 3H); b: (H,); v: (H,).

    Returns (B, S) attention weights, i.e.
    torch.transpose(F.softmax(concat_atten, 0), 0, 1).
    """
    B, S, H = encoder_outputs.shape
    # tiny glue: per-batch hidden rows + parameter-only folds (no (B,S,3H) slab)
    hidden2 = jnp.concatenate([hidden[0], hidden[1]], axis=1)          # (B, 2H)
    u = v @ W                                                          # (3H,)
    u_h = u[: 2 * H].reshape(1, 2 * H)
    u_e = u[2 * H:].reshape(1, H)
    c = jnp.dot(v, b).reshape(1, 1)

    # As many batch rows per grid step as practical: amortizes the ~0.35us/step
    # pipeline overhead and gives a lane-dense (TB, S) output tile.
    tb = B if B <= 128 else 128
    assert B % tb == 0, "keep batch blocks exact at these sizes"
    # TODO(synk): tile S (online softmax) / set vmem_limit_bytes before running
    # at production S*H where a full (tb, S, H) f32 slab would exceed VMEM.

    out = pl.pallas_call(
        _attn_kernel,
        out_shape=jax.ShapeDtypeStruct((B, S), jnp.float32),
        grid=(B // tb,),
        in_specs=[
            pl.BlockSpec((tb, S, H), lambda i: (i, 0, 0)),     # encoder slab
            pl.BlockSpec((tb, 2 * H), lambda i: (i, 0)),       # hidden2 rows
            pl.BlockSpec((1, H), lambda i: (0, 0)),            # u_e (resident)
            pl.BlockSpec((1, 2 * H), lambda i: (0, 0)),        # u_h (resident)
            pl.BlockSpec((1, 1), lambda i: (0, 0)),            # c = v.b
        ],
        out_specs=pl.BlockSpec((tb, S), lambda i: (i, 0)),
        compiler_params=pltpu.CompilerParams(
            dimension_semantics=("parallel",)),   # independent batch rows
    )(encoder_outputs, hidden2, u_e, u_h, c)
    return out                                                         # (B, S)


def attn_reference(hidden, encoder_outputs, W, b, v):
    """Pure-JAX reference mirroring the PyTorch forward (no folds)."""
    B, S, H = encoder_outputs.shape
    hidden2 = jnp.concatenate([hidden[0], hidden[1]], axis=1)
    x = jnp.concatenate(
        [jnp.broadcast_to(hidden2[:, None, :], (B, S, 2 * H)), encoder_outputs],
        axis=-1)
    energy = jnp.einsum('bsk,hk->bsh', x, W) + b                       # Linear
    e = jnp.einsum('bsh,h->bs', energy, v)                             # v . energy
    return jax.nn.softmax(e, axis=1)                                   # (B, S)


if __name__ == "__main__":
    key = jax.random.PRNGKey(0)
    B, S, H = 2, 8, 32
    k1, k2, k3, k4, k5 = jax.random.split(key, 5)

    # deterministic synthetic parameters (module __init__ shapes)
    hidden = jax.random.normal(k1, (2, B, H), jnp.float32)             # (2, B, H)
    enc = jax.random.normal(k2, (B, S, H), jnp.float32)                # (B, S, H)
    W = jax.random.normal(k3, (H, 3 * H), jnp.float32) * 0.1           # nn.Linear(3H,H).weight
    b = jax.random.normal(k4, (H,), jnp.float32) * 0.1                 # nn.Linear(3H,H).bias
    v = jax.random.normal(k5, (H,), jnp.float32) * 0.1                 # self.v

    out = attn_forward(hidden, enc, W, b, v)
    jax.block_until_ready(out)

    ref = attn_reference(hidden, enc, W, b, v)
    assert out.shape == (B, S), out.shape
    assert jnp.allclose(out, ref, atol=1e-5, rtol=1e-5), "mismatch vs reference"
    print("KERNEL_OK")
</pallas_src>

<mosaic_0001>
module attributes {stable_mosaic.version = 11 : i64} {
  func.func @_attn_kernel(%arg0: i32, %arg1: memref<2x8x32xf32, #tpu.memory_space<vmem>>, %arg2: memref<2x64xf32, #tpu.memory_space<vmem>>, %arg3: memref<1x32xf32, #tpu.memory_space<vmem>>, %arg4: memref<1x64xf32, #tpu.memory_space<vmem>>, %arg5: memref<1x1xf32, #tpu.memory_space<vmem>>, %arg6: memref<2x8xf32, #tpu.memory_space<vmem>>) attributes {dimension_semantics = [#tpu.dimension_semantics<parallel>], iteration_bounds = array<i64: 1>, scalar_prefetch = 0 : i64, scratch_operands = 0 : i64, tpu.core_type = #tpu.core_type<tc>, window_params = [{transform_indices = @transform_0, window_bounds = array<i64: 2, 8, 32>}, {transform_indices = @transform_1, window_bounds = array<i64: 2, 64>}, {pipeline_mode = #tpu.pipeline_mode<synchronous>, transform_indices = @transform_2, window_bounds = array<i64: 1, 32>}, {pipeline_mode = #tpu.pipeline_mode<synchronous>, transform_indices = @transform_3, window_bounds = array<i64: 1, 64>}, {pipeline_mode = #tpu.pipeline_mode<synchronous>, transform_indices = @transform_4, window_bounds = array<i64: 1, 1>}, {transform_indices = @transform_5, window_bounds = array<i64: 2, 8>}]} {
    %c0 = arith.constant 0 : index
    %c0_0 = arith.constant 0 : index
    %c0_1 = arith.constant 0 : index
    %0 = vector.load %arg1[%c0, %c0_0, %c0_1] : memref<2x8x32xf32, #tpu.memory_space<vmem>>, vector<2x8x32xf32>
    %c0_2 = arith.constant 0 : index
    %c0_3 = arith.constant 0 : index
    %1 = vector.load %arg3[%c0_2, %c0_3] : memref<1x32xf32, #tpu.memory_space<vmem>>, vector<1x32xf32>
    %2 = vector.shape_cast %1 : vector<1x32xf32> to vector<1x1x32xf32>
    %3 = vector.broadcast %2 : vector<1x1x32xf32> to vector<2x8x32xf32>
    %4 = arith.mulf %0, %3 : vector<2x8x32xf32>
    %cst = arith.constant dense<0.000000e+00> : vector<2x8xf32>
    %5 = vector.multi_reduction <add>, %4, %cst [2] : vector<2x8x32xf32> to vector<2x8xf32>
    %c0_4 = arith.constant 0 : index
    %c0_5 = arith.constant 0 : index
    %6 = vector.load %arg2[%c0_4, %c0_5] : memref<2x64xf32, #tpu.memory_space<vmem>>, vector<2x64xf32>
    %c0_6 = arith.constant 0 : index
    %c0_7 = arith.constant 0 : index
    %7 = vector.load %arg4[%c0_6, %c0_7] : memref<1x64xf32, #tpu.memory_space<vmem>>, vector<1x64xf32>
    %8 = vector.broadcast %7 : vector<1x64xf32> to vector<2x64xf32>
    %9 = arith.mulf %6, %8 : vector<2x64xf32>
    %cst_8 = arith.constant dense<0.000000e+00> : vector<2xf32>
    %10 = vector.multi_reduction <add>, %9, %cst_8 [1] : vector<2x64xf32> to vector<2xf32>
    %11 = vector.shape_cast %10 : vector<2xf32> to vector<2x1xf32>
    %12 = vector.broadcast %11 : vector<2x1xf32> to vector<2x8xf32>
    %13 = arith.addf %5, %12 : vector<2x8xf32>
    %c0_9 = arith.constant 0 : index
    %c0_10 = arith.constant 0 : index
    %14 = vector.load %arg5[%c0_9, %c0_10] : memref<1x1xf32, #tpu.memory_space<vmem>>, vector<1x1xf32>
    %15 = vector.broadcast %14 : vector<1x1xf32> to vector<2x8xf32>
    %16 = arith.addf %13, %15 : vector<2x8xf32>
    %cst_11 = arith.constant dense<0xFF800000> : vector<2xf32>
    %17 = vector.multi_reduction <maximumf>, %16, %cst_11 [1] : vector<2x8xf32> to vector<2xf32>
    %18 = vector.shape_cast %17 : vector<2xf32> to vector<2x1xf32>
    %19 = vector.broadcast %18 : vector<2x1xf32> to vector<2x8xf32>
    %20 = arith.subf %16, %19 : vector<2x8xf32>
    %21 = math.exp %20 : vector<2x8xf32>
    %cst_12 = arith.constant dense<0.000000e+00> : vector<2xf32>
    %22 = vector.multi_reduction <add>, %21, %cst_12 [1] : vector<2x8xf32> to vector<2xf32>
    %23 = vector.shape_cast %22 : vector<2xf32> to vector<2x1xf32>
    %24 = tpu.reciprocal %23 : vector<2x1xf32> -> vector<2x1xf32>
    %25 = vector.broadcast %24 : vector<2x1xf32> to vector<2x8xf32>
    %26 = arith.mulf %21, %25 : vector<2x8xf32>
    %c0_13 = arith.constant 0 : index
    %c0_14 = arith.constant 0 : index
    %27 = vector.load %arg6[%c0_13, %c0_14] : memref<2x8xf32, #tpu.memory_space<vmem>>, vector<2x8xf32>
    tpu.vector_store %arg6[%c0_13, %c0_14], %26 {strides = array<i32>} : memref<2x8xf32, #tpu.memory_space<vmem>>, vector<2x8xf32>,
    return
  }
  func.func @transform_0(%arg0: i32) -> (i32, i32, i32) {
    %c0_i32 = arith.constant 0 : i32
    %c0_i32_0 = arith.constant 0 : i32
    %c0_i32_1 = arith.constant 0 : i32
    return %arg0, %c0_i32, %c0_i32_0 : i32, i32, i32
  }
  func.func @transform_1(%arg0: i32) -> (i32, i32) {
    %c0_i32 = arith.constant 0 : i32
    %c0_i32_0 = arith.constant 0 : i32
    return %arg0, %c0_i32 : i32, i32
  }
  func.func @transform_2(%arg0: i32) -> (i32, i32) {
    %c0_i32 = arith.constant 0 : i32
    %c0_i32_0 = arith.constant 0 : i32
    %c0_i32_1 = arith.constant 0 : i32
    return %c0_i32, %c0_i32_0 : i32, i32
  }
  func.func @transform_3(%arg0: i32) -> (i32, i32) {
    %c0_i32 = arith.constant 0 : i32
    %c0_i32_0 = arith.constant 0 : i32
    %c0_i32_1 = arith.constant 0 : i32
    return %c0_i32, %c0_i32_0 : i32, i32
  }
  func.func @transform_4(%arg0: i32) -> (i32, i32) {
    %c0_i32 = arith.constant 0 : i32
    %c0_i32_0 = arith.constant 0 : i32
    %c0_i32_1 = arith.constant 0 : i32
    return %c0_i32, %c0_i32_0 : i32, i32
  }
  func.func @transform_5(%arg0: i32) -> (i32, i32) {
    %c0_i32 = arith.constant 0 : i32
    %c0_i32_0 = arith.constant 0 : i32
    return %arg0, %c0_i32 : i32, i32
  }
}

</mosaic_0001>

<llo_original>
// kernel: tpu_custom_call.1
$region0: #{tpu_custom_call.1}
  #allocation0 [shape = 'u32[]', space=smem, size = 0x4, offset = 0x4, fixed_abs, tag = 'smem constant byte address 0x4 - core index']
  #allocation1 [shape = 'u32[144,128]{1,0:T(1,128)}', space=vmem, size = 0x12000, scoped, tag = 'internal scratch']
  #allocation2 [shape = 'f32[1,1]{1,0:T(1,128)S(1)}', space=vmem, size = 0x200, scoped, tag = 'scoped memory for tpu_custom_call.1']
  %s0 = inlined_call_operand.hbm [shape: f32[2,8,32], index: 0, kind: input, shape index: {}]
  %s1 = inlined_call_operand.vmem [shape: f32[2,64], index: 1, kind: input, shape index: {}]
  %s2 = inlined_call_operand.vmem [shape: f32[1,32], index: 2, kind: input, shape index: {}]
  %s3 = inlined_call_operand.vmem [shape: f32[1,64], index: 3, kind: input, shape index: {}]
  %s4 = inlined_call_operand.<no memory space> [shape: f32[1,1], index: 4, kind: input, shape index: {}]
  %s5 = inlined_call_operand.hbm [shape: f32[2,8], index: 5, kind: output, shape index: {}]
  %s6 = sld [smem:[#allocation0]]
  $region34: #{tpu_custom_call.1} parent=0
    _
  %s8 = ssub.s32 1, %s6
  %s9 = scalar_select 0, %s8, %s6
  %v10 = vstv %s4
  %11 = vst [vmem:[#allocation2] sm:$0x1] %v10
  $region1: #{tpu_custom_call.1} parent=0
    #allocation3 [shape = 'u8[8192]{0}', space=vmem, size = 0x2000, scoped, tag = 'input window, operand 0, single buffered']
    #allocation4 [shape = 's32[1]{0}', space=sflag, size = 0x4, scoped, tag = 'scoped memory for tpu_custom_call.1']
    #allocation5 [shape = 's32[1]{0}', space=sflag, size = 0x4, scoped, tag = 'scoped memory for tpu_custom_call.1']
    #allocation6 [shape = 'u8[1024]{0}', space=vmem, size = 0x400, scoped, tag = 'output window, operand 0, single buffered']
    %12 = vsyncpa [#allocation4], 0
    %13 = vsyncpa [#allocation5], 0
    // Predicated region
    $region2: #{tpu_custom_call.1} parent=1 // pred_check
      _
    $region3: #{tpu_custom_call.1} parent=1 // pred_check_branch
      %15 = sbr.rel (0) target = $region5
    $region4: #{tpu_custom_call.1} parent=1 // pred_region
      %s17 = ssub.s32 256, 256
      %18 = vsyncadd [#allocation4], %s17
      %s19 = sshll.u32 [#allocation3], 4
      %s20 = int_to_ptr.vmem [resolvable:$true] %s19
      %25 = dma.hbm_to_vmem [thread:$0]  %s0, 256, %s20, [#allocation4], 128, 128, 8
    $region5: #{tpu_custom_call.1} parent=1 // pred_fallthru
      _
    // Predicated region
    $region6: #{tpu_custom_call.1} parent=1 // pred_check
      _
    $region7: #{tpu_custom_call.1} parent=1 // pred_check_branch
      %27 = sbr.rel (0) target = $region9
    $region8: #{tpu_custom_call.1} parent=1 // pred_region
      _
    $region9: #{tpu_custom_call.1} parent=1 // pred_fallthru
      _
    // Predicated region
    $region10: #{tpu_custom_call.1} parent=1 // pred_check
      _
    $region11: #{tpu_custom_call.1} parent=1 // pred_check_branch
      %29 = sbr.rel (0) target = $region13
    $region12: #{tpu_custom_call.1} parent=1 // pred_region
      _
    $region13: #{tpu_custom_call.1} parent=1 // pred_fallthru
      _
    // Predicated region
    $region14: #{tpu_custom_call.1} parent=1 // pred_check
      _
    $region15: #{tpu_custom_call.1} parent=1 // pred_check_branch
      %31 = sbr.rel (0) target = $region17
    $region16: #{tpu_custom_call.1} parent=1 // pred_region
      _
    $region17: #{tpu_custom_call.1} parent=1 // pred_fallthru
      _
    // Predicated region
    $region18: #{tpu_custom_call.1} parent=1 // pred_check
      _
    $region19: #{tpu_custom_call.1} parent=1 // pred_check_branch
      %33 = sbr.rel (0) target = $region21
    $region20: #{tpu_custom_call.1} parent=1 // pred_region
      _
    $region21: #{tpu_custom_call.1} parent=1 // pred_fallthru
      _
    // Predicated region
    $region22: #{tpu_custom_call.1} parent=1 // pred_check
      _
    $region23: #{tpu_custom_call.1} parent=1 // pred_check_branch
      %35 = sbr.rel (0) target = $region25
    $region24: #{tpu_custom_call.1} parent=1 // pred_region
      %36 = dma.done [#allocation4], 256
    $region25: #{tpu_custom_call.1} parent=1 // pred_fallthru
      _
    %v37 = vld [vmem:[#allocation3] sm:$0xff]
    %v38 = vld [vmem:[#allocation3 + $0x8] sm:$0xff]
    %v39 = vld [vmem:[%s2] sm:$0x1]
    %v41 = vlaneseq
    %v42 = vshrl.u32 %v41, 7
    %v43 = vsub.s32 0, %v42
    %v44 = vrot.slane %v39, %v43
    %v46 = vmul.f32 %v37, %v44
    %v47 = vmul.f32 %v38, %v44
    %vm48 = vcmask 261120
    %v49 = vsel %vm48, %v46, 0.0
    %50 = vadd.xlane.f32.xlu0 %v49
    %v51 = vpop.xlane.xlu0 %50
    %v52 = vsel %vm48, %v47, 0.0
    %53 = vadd.xlane.f32.xlu0 %v52
    %v54 = vpop.xlane.xlu0 %53
    %v55 = vld [vmem:[%s1] sm:$0x3]
    %v56 = vld [vmem:[%s3] sm:$0x1]
    %v58 = vlaneseq
    %v59 = vshrl.u32 %v58, 7
    %v60 = vsub.s32 0, %v59
    %v61 = vrot.slane %v56, %v60
    %v63 = vmul.f32 %v55, %v61
    %vm64 = vcmask 517120
    %v65 = vsel %vm64, %v63, 0.0
    %66 = vadd.xlane.f32.xlu0 %v65
    %v67 = vpop.xlane.xlu0 %66
    %v69 = vlaneseq
    %v70 = vshrl.u32 %v69, 7
    %v71 = vsub.s32 0, %v70
    %v72 = vrot.slane %v67, %v71
    %v73 = vlaneseq
    %v74 = vshrl.u32 %v73, 7
    %v75 = vsub.s32 1, %v74
    %v76 = vrot.slane %v67, %v75
    %v79 = vadd.f32 %v51, %v72
    %v80 = vadd.f32 %v54, %v76
    %v81 = vld [vmem:[#allocation2] sm:$0x1]
    %v83 = vlaneseq
    %v84 = vshrl.u32 %v83, 7
    %v85 = vsub.s32 0, %v84
    %v86 = vrot.slane %v81, %v85
    %87 = vset.pattern.permute.xlu0 0
    %88 = vperm.xlu0 %87, %v86
    %v89 = vpop.permute.xlu0 %88
    %v91 = vadd.f32 %v79, %v89
    %v92 = vadd.f32 %v80, %v89
    %95 = vset.pattern.permute.xlu0 0
    %96 = vperm.xlu0 %95, %v91
    %v97 = vpop.permute.xlu0 %96
    %98 = vset.pattern.permute.xlu0 0
    %99 = vperm.xlu0 %98, %v92
    %v100 = vpop.permute.xlu0 %99
    %v101 = vlaneseq
    %v102 = vand.u32 %v101, 127
    %v103 = vlaneseq
    %v104 = vshrl.u32 %v103, 7
    %v105 = vsub.s32 %v102, %v104
    %v106 = vrot.slane %v97, %v105
    %v107 = vlaneseq
    %v108 = vshrl.u32 %v107, 7
    %v109 = vsub.s32 %v102, %v108
    %v110 = vrot.slane %v100, %v109
    %vm111 = vcmask 1041409
    %v112 = vsel %vm111, %v110, %v106
    %vm114 = vcmask 58368
    %v115 = vsel %vm114, %v112, -inf
    %116 = vmax.xlane.f32.xlu0 %v115
    %v117 = vpop.xlane.xlu0 %116
    %v119 = vlaneseq
    %v120 = vshrl.u32 %v119, 7
    %v121 = vsub.s32 0, %v120
    %v122 = vrot.slane %v117, %v121
    %v123 = vlaneseq
    %v124 = vshrl.u32 %v123, 7
    %v125 = vsub.s32 1, %v124
    %v126 = vrot.slane %v117, %v125
    %v129 = vsub.f32 %v91, %v122
    %v130 = vsub.f32 %v92, %v126
    %v131 = vmul.f32 %v129, 1.442695
    %v132 = vpow.pop %v131
    %v133 = vmul.f32 %v130, 1.442695
    %v134 = vpow.pop %v133
    %137 = vset.pattern.permute.xlu0 0
    %138 = vperm.xlu0 %137, %v132
    %v139 = vpop.permute.xlu0 %138
    %140 = vset.pattern.permute.xlu0 0
    %141 = vperm.xlu0 %140, %v134
    %v142 = vpop.permute.xlu0 %141
    %v143 = vlaneseq
    %v144 = vshrl.u32 %v143, 7
    %v145 = vsub.s32 %v102, %v144
    %v146 = vrot.slane %v139, %v145
    %v147 = vlaneseq
    %v148 = vshrl.u32 %v147, 7
    %v149 = vsub.s32 %v102, %v148
    %v150 = vrot.slane %v142, %v149
    %v151 = vsel %vm111, %v150, %v146
    %v153 = vsel %vm114, %v151, 0.0
    %154 = vadd.xlane.f32.xlu0 %v153
    %v155 = vpop.xlane.xlu0 %154
    %v156 = vrcp.pop %v155
    %v158 = vlaneseq
    %v159 = vshrl.u32 %v158, 7
    %v160 = vsub.s32 0, %v159
    %v161 = vrot.slane %v156, %v160
    %v162 = vlaneseq
    %v163 = vshrl.u32 %v162, 7
    %v164 = vsub.s32 1, %v163
    %v165 = vrot.slane %v156, %v164
    %v168 = vmul.f32 %v132, %v161
    %v169 = vmul.f32 %v134, %v165
    %172 = vset.pattern.permute.xlu0 0
    %173 = vperm.xlu0 %172, %v168
    %v174 = vpop.permute.xlu0 %173
    %175 = vset.pattern.permute.xlu0 0
    %176 = vperm.xlu0 %175, %v169
    %v177 = vpop.permute.xlu0 %176
    %v178 = vlaneseq
    %v179 = vshrl.u32 %v178, 7
    %v180 = vsub.s32 %v102, %v179
    %v181 = vrot.slane %v174, %v180
    %v182 = vlaneseq
    %v183 = vshrl.u32 %v182, 7
    %v184 = vsub.s32 %v102, %v183
    %v185 = vrot.slane %v177, %v184
    %v186 = vsel %vm111, %v185, %v181
    %188 = vst.msk [vmem:[#allocation6] sm:$0x3] %vm114, %v186
    // Predicated region
    $region26: #{tpu_custom_call.1} parent=1 // pred_check
      _
    $region27: #{tpu_custom_call.1} parent=1 // pred_check_branch
      %190 = sbr.rel (0) target = $region29
    $region28: #{tpu_custom_call.1} parent=1 // pred_region
      %s192 = ssub.s32 32, 32
      %193 = vsyncadd [#allocation5], %s192
      %s195 = sshll.u32 [#allocation6], 4
      %s196 = int_to_ptr.vmem [resolvable:$true] %s195
      %198 = dma.vmem_to_hbm [thread:$0]  %s196, 32, %s5, [#allocation5]
    $region29: #{tpu_custom_call.1} parent=1 // pred_fallthru
      _
    // Predicated region
    $region30: #{tpu_custom_call.1} parent=1 // pred_check
      _
    $region31: #{tpu_custom_call.1} parent=1 // pred_check_branch
      %200 = sbr.rel (0) target = $region33
    $region32: #{tpu_custom_call.1} parent=1 // pred_region
      %201 = dma.done [#allocation5], 32
    $region33: #{tpu_custom_call.1} parent=1 // pred_fallthru
      _
    %202 = vsyncpa [#allocation4], 1
    %203 = vsyncpa [#allocation5], 1

</llo_original>
